<compile_context>
chip_gen: v6e
topology: v6e:2x2x1
jax: 0.10.0
libtpu: 0.0.40
codegen_flags: <defaults>
</compile_context>

<pallas_src>
import functools
import numpy as np
import jax
import jax.numpy as jnp
from jax.experimental import pallas as pl
from jax.experimental.pallas import tpu as pltpu


# ----------------------------------------------------------------------------
# Deterministic parameter init, replicating make_numpy_weights default path
# (np_ortho with scale=1.0) and make_numpy_biases (zeros).
# ----------------------------------------------------------------------------
def np_ortho(shape, random_state, scale=1.0):
    g = random_state.randn(*shape)
    U, S, VT = np.linalg.svd(g, full_matrices=False)
    res = U if U.shape == shape else VT
    return (scale * res.reshape(shape)).astype("float32")


def make_linear_params(input_dim, output_dim, seed=1999, param_dtype=jnp.float32):
    rs = np.random.RandomState(seed)
    w = np_ortho((input_dim, output_dim), rs, scale=1.0)   # default init = ortho
    b = np.zeros((output_dim,), dtype="float32")           # zero biases
    # Pre-cast W once at creation (bf16-MXU path then streams half the HBM bytes
    # with no per-call cast).
    return jnp.asarray(w).astype(param_dtype), jnp.asarray(b)


# ----------------------------------------------------------------------------
# Small helpers.
# ----------------------------------------------------------------------------
def _round_up(x, m):
    return ((x + m - 1) // m) * m


def _sublane(in_dtype, out_dtype):
    # bf16 packs two rows per sublane -> use 16-row alignment when any operand is 16-bit.
    m = min(jnp.dtype(in_dtype).itemsize, jnp.dtype(out_dtype).itemsize)
    return 16 if m == 2 else 8


def _physical_vmem_bytes():
    try:
        info = pltpu.get_tpu_info()
        for attr in ("vmem_capacity_bytes", "vmem_size_bytes", "vmem_bytes"):
            v = getattr(info, attr, None)
            if v:
                return int(v)
    except Exception:
        pass
    return 64 * 1024 * 1024  # conservative fallback: v7x per-TensorCore VMEM


def _vmem_limit_bytes():
    phys = _physical_vmem_bytes()
    # v5e/v6e (128 MiB) -> 96 MiB scoped limit; v7x (64 MiB) -> 48 MiB.
    return min(96 * 1024 * 1024, (phys * 3) // 4)


# ----------------------------------------------------------------------------
# Kernels.
# ----------------------------------------------------------------------------
def _resident_kernel(*refs, num_inputs, k_offsets, k_sizes):
    """Resident-weight path: grid over M only; concat folded into the K sum."""
    x_refs = refs[:num_inputs]
    w_ref = refs[num_inputs]
    b_ref = refs[num_inputs + 1]
    o_ref = refs[num_inputs + 2]

    w = w_ref[...]
    acc = None
    for i in range(num_inputs):
        off, ks = k_offsets[i], k_sizes[i]
        wi = w if (off == 0 and ks == w.shape[0]) else w[off:off + ks, :]
        d = jnp.dot(x_refs[i][...], wi, preferred_element_type=jnp.float32)
        acc = d if acc is None else acc + d
    o_ref[...] = (acc + b_ref[...].astype(jnp.float32)).astype(o_ref.dtype)


def _tiled_kernel(x_ref, w_ref, b_ref, o_ref, acc_ref):
    """Generic (M, N, K) tiled path with f32 VMEM accumulator."""
    k = pl.program_id(2)
    prod = jnp.dot(x_ref[...], w_ref[...], preferred_element_type=jnp.float32)

    @pl.when(k == 0)
    def _():
        # Write the first partial product directly — no zero-init + add pass.
        acc_ref[...] = prod

    @pl.when(k > 0)
    def _():
        acc_ref[...] += prod

    @pl.when(k == pl.num_programs(2) - 1)
    def _():
        # Bias added once per output tile (finalize), not per K step.
        o_ref[...] = (acc_ref[...] + b_ref[...].astype(jnp.float32)).astype(o_ref.dtype)


# ----------------------------------------------------------------------------
# Fast path: weight resident in VMEM, grid over M only.
# ----------------------------------------------------------------------------
def _linear_fast_path(xs, w, b2d, out_dtype, vmem_limit):
    M = xs[0].shape[0]
    K, N = w.shape
    in_dtype = xs[0].dtype
    itemsize = jnp.dtype(in_dtype).itemsize
    w_itemsize = jnp.dtype(w.dtype).itemsize
    out_itemsize = jnp.dtype(out_dtype).itemsize
    sub = _sublane(in_dtype, out_dtype)

    budget = int(vmem_limit * 0.9)
    w_cost = 2 * K * N * w_itemsize  # conservative: assume W still double-buffered

    def fits(tm_):
        per_m = 2 * tm_ * (K * itemsize + N * out_itemsize)
        return w_cost + per_m + 2 * N * 4 <= budget

    tm = min(512, _round_up(M, sub))
    while tm > sub and not fits(tm):
        tm = max(sub, _round_up(tm // 2, sub))
    if not fits(tm):
        return None  # W (+ working set) too big for VMEM -> use tiled path

    # Megacore: ensure the parallel M axis has >= 2 blocks when the split is
    # worthwhile (v7x has 2 TensorCores; a single M block idles one of them).
    if M >= 256 and _round_up(M, tm) // tm == 1:
        tm = _round_up(-(-M // 2), sub)

    Mp = _round_up(M, tm)
    if Mp != M:
        xs = [jnp.pad(x, ((0, Mp - M), (0, 0))) for x in xs]

    k_sizes = tuple(int(x.shape[1]) for x in xs)
    k_offsets = tuple(int(o) for o in np.cumsum((0,) + k_sizes[:-1]))

    in_specs = [pl.BlockSpec((tm, ks), lambda m: (m, 0)) for ks in k_sizes]
    in_specs.append(pl.BlockSpec((K, N), lambda m: (0, 0)))   # W resident (constant index)
    in_specs.append(pl.BlockSpec((1, N), lambda m: (0, 0)))   # bias resident

    out = pl.pallas_call(
        functools.partial(_resident_kernel, num_inputs=len(xs),
                          k_offsets=k_offsets, k_sizes=k_sizes),
        out_shape=jax.ShapeDtypeStruct((Mp, N), out_dtype),
        grid_spec=pltpu.PrefetchScalarGridSpec(
            num_scalar_prefetch=0,
            grid=(Mp // tm,),
            in_specs=in_specs,
            out_specs=pl.BlockSpec((tm, N), lambda m: (m, 0)),
        ),
        compiler_params=pltpu.CompilerParams(
            dimension_semantics=("parallel",),
            vmem_limit_bytes=vmem_limit,
        ),
        cost_estimate=pl.CostEstimate(
            flops=2 * M * N * K,
            transcendentals=0,
            bytes_accessed=(sum(Mp * ks * itemsize for ks in k_sizes)
                            + K * N * w_itemsize + N * 4
                            + Mp * N * out_itemsize),
        ),
    )(*xs, w, b2d)

    if Mp != M:
        out = out[:M]
    return out


# ----------------------------------------------------------------------------
# Generic tiled fallback (large K*N that does not fit VMEM).
# ----------------------------------------------------------------------------
def _linear_tiled_path(x2d, w, b2d, out_dtype, vmem_limit):
    M, K = x2d.shape
    K2, N = w.shape
    assert K == K2
    in_dtype = x2d.dtype
    itemsize = jnp.dtype(in_dtype).itemsize
    w_itemsize = jnp.dtype(w.dtype).itemsize
    out_itemsize = jnp.dtype(out_dtype).itemsize
    sub = _sublane(in_dtype, out_dtype)

    tm = min(512, _round_up(M, sub))
    tn = min(512, _round_up(N, 128))
    tk = min(4096 // itemsize, _round_up(K, 128))   # 1024 f32 / 2048 bf16

    budget = int(vmem_limit * 0.9)

    def usage(tm_, tn_, tk_):
        return (2 * (tm_ * tk_ + tk_ * tn_) * itemsize
                + 2 * tm_ * tn_ * out_itemsize
                + tm_ * tn_ * 4 + 2 * tn_ * 4)

    while tk > 128 and usage(tm, tn, tk) > budget:
        tk = max(128, _round_up(tk // 2, 128))
    while tn > 128 and usage(tm, tn, tk) > budget:
        tn = max(128, _round_up(tn // 2, 128))

    Mp, Np, Kp = _round_up(M, tm), _round_up(N, tn), _round_up(K, tk)

    # Zero-pad to tile multiples (zeros contribute nothing to the dot product).
    if (Mp, Kp) != (M, K):
        x2d = jnp.pad(x2d, ((0, Mp - M), (0, Kp - K)))
    if (Kp, Np) != (K, N):
        w = jnp.pad(w, ((0, Kp - K), (0, Np - N)))
    if Np != N:
        b2d = jnp.pad(b2d, ((0, 0), (0, Np - N)))

    grid = (Mp // tm, Np // tn, Kp // tk)

    out = pl.pallas_call(
        _tiled_kernel,
        out_shape=jax.ShapeDtypeStruct((Mp, Np), out_dtype),
        grid_spec=pltpu.PrefetchScalarGridSpec(
            num_scalar_prefetch=0,
            grid=grid,
            in_specs=[
                pl.BlockSpec((tm, tk), lambda i, j, k: (i, k)),
                pl.BlockSpec((tk, tn), lambda i, j, k: (k, j)),
                pl.BlockSpec((1, tn), lambda i, j, k: (0, j)),
            ],
            out_specs=pl.BlockSpec((tm, tn), lambda i, j, k: (i, j)),
            scratch_shapes=[pltpu.VMEM((tm, tn), jnp.float32)],
        ),
        compiler_params=pltpu.CompilerParams(
            dimension_semantics=("parallel", "parallel", "arbitrary"),
            vmem_limit_bytes=vmem_limit,
        ),
        cost_estimate=pl.CostEstimate(
            flops=2 * Mp * Np * Kp,
            transcendentals=0,
            # Tiled re-reads: x streamed Np/tn times, W streamed Mp/tm times.
            bytes_accessed=(Mp * Kp * itemsize * (Np // tn)
                            + Kp * Np * w_itemsize * (Mp // tm)
                            + Mp * Np * out_itemsize + Np * 4),
        ),
    )(x2d, w, b2d)

    if (Mp, Np) != (M, N):
        out = out[:M, :N]
    return out


# ----------------------------------------------------------------------------
# Forward matching Linear.forward semantics.
# ----------------------------------------------------------------------------
def linear_forward(list_of_inputs, w, b, *, use_bf16_mxu=False,
                   out_dtype=jnp.float32, allow_fast_path=True):
    nd = list_of_inputs[0].ndim
    if nd not in (2, 3):
        raise ValueError("dot() only supports 2D or 3D first argument")

    # Flatten leading dims to M; keep each input separate so the fast path can
    # fold the concat into the K reduction (no HBM concat copy).
    xs = []
    for x in list_of_inputs:
        if nd == 3:
            B, S, Ki = x.shape
            x = x.reshape(B * S, Ki)
        xs.append(x)

    if use_bf16_mxu:
        # Pre-cast operands outside the kernel so HBM streams bf16 (half the bytes).
        xs = [x.astype(jnp.bfloat16) if x.dtype == jnp.float32 else x for x in xs]
        if w.dtype == jnp.float32:
            w = w.astype(jnp.bfloat16)   # ideally done once at param creation

    if b is None:
        b = jnp.zeros((w.shape[1],), jnp.float32)
    b2d = b.reshape(1, -1).astype(jnp.float32)

    # TODO(synk): dropout_flag_prob_keep path not implemented (forward default is None).

    vmem_limit = _vmem_limit_bytes()

    out2d = None
    if allow_fast_path:
        out2d = _linear_fast_path(xs, w, b2d, out_dtype, vmem_limit)
    if out2d is None:
        # TODO(synk): fold the multi-input concat into the K reduction of the
        # tiled path as well (per-input K segments via scalar-prefetched offsets);
        # only the resident-weight fast path folds it today.
        x2d = xs[0] if len(xs) == 1 else jnp.concatenate(xs, axis=1)
        out2d = _linear_tiled_path(x2d, w, b2d, out_dtype, vmem_limit)

    if nd == 3:
        B, S = list_of_inputs[0].shape[:2]
        return out2d.reshape(B, S, w.shape[1])
    return out2d


if __name__ == "__main__":
    key = jax.random.PRNGKey(0)
    k1, k2 = jax.random.split(key)

    # list_of_input_dims = [16, 16] -> input_dim = 32, output_dim = 32
    batch, seq = 2, 8
    d1, d2, output_dim = 16, 16, 32
    x1 = jax.random.normal(k1, (batch, seq, d1), dtype=jnp.float32)
    x2 = jax.random.normal(k2, (batch, seq, d2), dtype=jnp.float32)

    w, b = make_linear_params(d1 + d2, output_dim)
    ref = jnp.einsum("ijk,kl->ijl", jnp.concatenate([x1, x2], axis=-1), w) + b

    # 1) Resident-weight fast path (f32 MXU), multi-input concat folded in-kernel.
    out = jax.block_until_ready(linear_forward([x1, x2], w, b))
    assert out.shape == (batch, seq, output_dim)
    assert jnp.allclose(out, ref, atol=1e-5, rtol=1e-5)

    # 2) Generic K-tiled path (forced) for coverage of the fallback kernel.
    out_tiled = jax.block_until_ready(
        linear_forward([x1, x2], w, b, allow_fast_path=False))
    assert jnp.allclose(out_tiled, ref, atol=1e-5, rtol=1e-5)

    # 3) bf16-MXU path with weights pre-cast once at creation (f32 accumulate).
    w_bf16, _ = make_linear_params(d1 + d2, output_dim, param_dtype=jnp.bfloat16)
    out_bf16 = jax.block_until_ready(
        linear_forward([x1, x2], w_bf16, b, use_bf16_mxu=True))
    assert jnp.allclose(out_bf16, ref, atol=5e-2, rtol=5e-2)

    print("KERNEL_OK")
</pallas_src>

<mosaic_0001>
module attributes {stable_mosaic.version = 11 : i64} {
  func.func @_resident_kernel(%arg0: i32, %arg1: memref<16x16xf32, #tpu.memory_space<vmem>>, %arg2: memref<16x16xf32, #tpu.memory_space<vmem>>, %arg3: memref<32x32xf32, #tpu.memory_space<vmem>>, %arg4: memref<1x32xf32, #tpu.memory_space<vmem>>, %arg5: memref<16x32xf32, #tpu.memory_space<vmem>>) attributes {dimension_semantics = [#tpu.dimension_semantics<parallel>], iteration_bounds = array<i64: 1>, scalar_prefetch = 0 : i64, scratch_operands = 0 : i64, tpu.core_type = #tpu.core_type<tc>, window_params = [{transform_indices = @transform_0, window_bounds = array<i64: 16, 16>}, {transform_indices = @transform_1, window_bounds = array<i64: 16, 16>}, {pipeline_mode = #tpu.pipeline_mode<synchronous>, transform_indices = @transform_2, window_bounds = array<i64: 32, 32>}, {pipeline_mode = #tpu.pipeline_mode<synchronous>, transform_indices = @transform_3, window_bounds = array<i64: 1, 32>}, {transform_indices = @transform_4, window_bounds = array<i64: 16, 32>}]} {
    %c0 = arith.constant 0 : index
    %c0_0 = arith.constant 0 : index
    %0 = vector.load %arg3[%c0, %c0_0] : memref<32x32xf32, #tpu.memory_space<vmem>>, vector<32x32xf32>
    %1 = vector.extract_strided_slice %0 {offsets = [0, 0], sizes = [16, 32], strides = [1, 1]} : vector<32x32xf32> to vector<16x32xf32>
    %c0_1 = arith.constant 0 : index
    %c0_2 = arith.constant 0 : index
    %2 = vector.load %arg1[%c0_1, %c0_2] : memref<16x16xf32, #tpu.memory_space<vmem>>, vector<16x16xf32>
    %cst = arith.constant dense<0.000000e+00> : vector<16x32xf32>
    %3 = tpu.matmul %2, %1, %cst {dimension_numbers = #tpu.dot_dimension_numbers<[1], [0], [0], [1], [0, 0, 1, 1], [], []>} : vector<16x16xf32>, vector<16x32xf32>, vector<16x32xf32> -> vector<16x32xf32>
    %4 = vector.extract_strided_slice %0 {offsets = [16, 0], sizes = [16, 32], strides = [1, 1]} : vector<32x32xf32> to vector<16x32xf32>
    %c0_3 = arith.constant 0 : index
    %c0_4 = arith.constant 0 : index
    %5 = vector.load %arg2[%c0_3, %c0_4] : memref<16x16xf32, #tpu.memory_space<vmem>>, vector<16x16xf32>
    %cst_5 = arith.constant dense<0.000000e+00> : vector<16x32xf32>
    %6 = tpu.matmul %5, %4, %cst_5 {dimension_numbers = #tpu.dot_dimension_numbers<[1], [0], [0], [1], [0, 0, 1, 1], [], []>} : vector<16x16xf32>, vector<16x32xf32>, vector<16x32xf32> -> vector<16x32xf32>
    %7 = arith.addf %3, %6 : vector<16x32xf32>
    %c0_6 = arith.constant 0 : index
    %c0_7 = arith.constant 0 : index
    %8 = vector.load %arg4[%c0_6, %c0_7] : memref<1x32xf32, #tpu.memory_space<vmem>>, vector<1x32xf32>
    %9 = vector.broadcast %8 : vector<1x32xf32> to vector<16x32xf32>
    %10 = arith.addf %7, %9 : vector<16x32xf32>
    %c0_8 = arith.constant 0 : index
    %c0_9 = arith.constant 0 : index
    %11 = vector.load %arg5[%c0_8, %c0_9] : memref<16x32xf32, #tpu.memory_space<vmem>>, vector<16x32xf32>
    tpu.vector_store %arg5[%c0_8, %c0_9], %10 {strides = array<i32>} : memref<16x32xf32, #tpu.memory_space<vmem>>, vector<16x32xf32>,
    return
  }
  func.func @transform_0(%arg0: i32) -> (i32, i32) {
    %c0_i32 = arith.constant 0 : i32
    %c0_i32_0 = arith.constant 0 : i32
    return %arg0, %c0_i32 : i32, i32
  }
  func.func @transform_1(%arg0: i32) -> (i32, i32) {
    %c0_i32 = arith.constant 0 : i32
    %c0_i32_0 = arith.constant 0 : i32
    return %arg0, %c0_i32 : i32, i32
  }
  func.func @transform_2(%arg0: i32) -> (i32, i32) {
    %c0_i32 = arith.constant 0 : i32
    %c0_i32_0 = arith.constant 0 : i32
    %c0_i32_1 = arith.constant 0 : i32
    return %c0_i32, %c0_i32_0 : i32, i32
  }
  func.func @transform_3(%arg0: i32) -> (i32, i32) {
    %c0_i32 = arith.constant 0 : i32
    %c0_i32_0 = arith.constant 0 : i32
    %c0_i32_1 = arith.constant 0 : i32
    return %c0_i32, %c0_i32_0 : i32, i32
  }
  func.func @transform_4(%arg0: i32) -> (i32, i32) {
    %c0_i32 = arith.constant 0 : i32
    %c0_i32_0 = arith.constant 0 : i32
    return %arg0, %c0_i32 : i32, i32
  }
}

</mosaic_0001>

<llo_original>
// kernel: tpu_custom_call.1
$region0: #{tpu_custom_call.1}
  #allocation0 [shape = 'u32[]', space=smem, size = 0x4, offset = 0x4, fixed_abs, tag = 'smem constant byte address 0x4 - core index']
  #allocation1 [shape = 'u32[144,128]{1,0:T(1,128)}', space=vmem, size = 0x12000, scoped, tag = 'internal scratch']
  %s0 = inlined_call_operand.hbm [shape: f32[16,16], index: 0, kind: input, shape index: {}]
  %s1 = inlined_call_operand.hbm [shape: f32[16,16], index: 1, kind: input, shape index: {}]
  %s2 = inlined_call_operand.hbm [shape: f32[32,32], index: 2, kind: input, shape index: {}]
  %s3 = inlined_call_operand.vmem [shape: f32[1,32], index: 3, kind: input, shape index: {}]
  %s4 = inlined_call_operand.hbm [shape: f32[16,32], index: 4, kind: output, shape index: {}]
  %s5 = sld [smem:[#allocation0]]
  $region38: #{tpu_custom_call.1} parent=0
    _
  %s7 = ssub.s32 1, %s5
  %s8 = scalar_select 0, %s7, %s5
  $region1: #{tpu_custom_call.1} parent=0
    #allocation2 [shape = 'u8[8192]{0}', space=vmem, size = 0x2000, scoped, tag = 'input window, operand 0, single buffered']
    #allocation3 [shape = 's32[1]{0}', space=sflag, size = 0x4, scoped, tag = 'scoped memory for tpu_custom_call.1']
    #allocation4 [shape = 's32[1]{0}', space=sflag, size = 0x4, scoped, tag = 'scoped memory for tpu_custom_call.1']
    #allocation5 [shape = 'u8[8192]{0}', space=vmem, size = 0x2000, scoped, tag = 'input window, operand 1, single buffered']
    #allocation6 [shape = 's32[1]{0}', space=sflag, size = 0x4, scoped, tag = 'scoped memory for tpu_custom_call.1']
    #allocation7 [shape = 'u8[16384]{0}', space=vmem, size = 0x4000, scoped, tag = 'input window, operand 2, single buffered']
    #allocation8 [shape = 'u8[8192]{0}', space=vmem, size = 0x2000, scoped, tag = 'output window, operand 0, single buffered']
    %9 = vsyncpa [#allocation3], 0
    %10 = vsyncpa [#allocation6], 0
    %11 = vsyncpa [#allocation4], 0
    // Predicated region
    $region2: #{tpu_custom_call.1} parent=1 // pred_check
      _
    $region3: #{tpu_custom_call.1} parent=1 // pred_check_branch
      %13 = sbr.rel (0) target = $region5
    $region4: #{tpu_custom_call.1} parent=1 // pred_region
      %s15 = ssub.s32 256, 256
      %16 = vsyncadd [#allocation3], %s15
      %s17 = sshll.u32 [#allocation2], 4
      %s18 = int_to_ptr.vmem [resolvable:$true] %s17
      %23 = dma.hbm_to_vmem [thread:$0]  %s0, 256, %s18, [#allocation3], 128, 128, 8
    $region5: #{tpu_custom_call.1} parent=1 // pred_fallthru
      _
    // Predicated region
    $region6: #{tpu_custom_call.1} parent=1 // pred_check
      _
    $region7: #{tpu_custom_call.1} parent=1 // pred_check_branch
      %25 = sbr.rel (0) target = $region9
    $region8: #{tpu_custom_call.1} parent=1 // pred_region
      %s27 = ssub.s32 256, 256
      %28 = vsyncadd [#allocation6], %s27
      %s29 = sshll.u32 [#allocation5], 4
      %s30 = int_to_ptr.vmem [resolvable:$true] %s29
      %35 = dma.hbm_to_vmem [thread:$0]  %s1, 256, %s30, [#allocation6], 128, 128, 8
    $region9: #{tpu_custom_call.1} parent=1 // pred_fallthru
      _
    // Predicated region
    $region10: #{tpu_custom_call.1} parent=1 // pred_check
      _
    $region11: #{tpu_custom_call.1} parent=1 // pred_check_branch
      %37 = sbr.rel (0) target = $region13
    $region12: #{tpu_custom_call.1} parent=1 // pred_region
      %s39 = ssub.s32 512, 512
      %40 = vsyncadd [#allocation6], %s39
      %s41 = sshll.u32 [#allocation7], 4
      %s42 = int_to_ptr.vmem [resolvable:$true] %s41
      %47 = dma.hbm_to_vmem [thread:$0]  %s2, 512, %s42, [#allocation6], 128, 128, 8
    $region13: #{tpu_custom_call.1} parent=1 // pred_fallthru
      _
    // Predicated region
    $region14: #{tpu_custom_call.1} parent=1 // pred_check
      _
    $region15: #{tpu_custom_call.1} parent=1 // pred_check_branch
      %49 = sbr.rel (0) target = $region17
    $region16: #{tpu_custom_call.1} parent=1 // pred_region
      _
    $region17: #{tpu_custom_call.1} parent=1 // pred_fallthru
      _
    // Predicated region
    $region18: #{tpu_custom_call.1} parent=1 // pred_check
      _
    $region19: #{tpu_custom_call.1} parent=1 // pred_check_branch
      %51 = sbr.rel (0) target = $region21
    $region20: #{tpu_custom_call.1} parent=1 // pred_region
      %52 = dma.done [#allocation3], 256
    $region21: #{tpu_custom_call.1} parent=1 // pred_fallthru
      _
    // Predicated region
    $region22: #{tpu_custom_call.1} parent=1 // pred_check
      _
    $region23: #{tpu_custom_call.1} parent=1 // pred_check_branch
      %54 = sbr.rel (0) target = $region25
    $region24: #{tpu_custom_call.1} parent=1 // pred_region
      %55 = dma.done [#allocation6], 256
    $region25: #{tpu_custom_call.1} parent=1 // pred_fallthru
      _
    // Predicated region
    $region26: #{tpu_custom_call.1} parent=1 // pred_check
      _
    $region27: #{tpu_custom_call.1} parent=1 // pred_check_branch
      %57 = sbr.rel (0) target = $region29
    $region28: #{tpu_custom_call.1} parent=1 // pred_region
      %58 = dma.done [#allocation6], 512
    $region29: #{tpu_custom_call.1} parent=1 // pred_fallthru
      _
    %v59 = vld [vmem:[#allocation7] sm:$0xff]
    %v60 = vld [vmem:[#allocation7 + $0x8] sm:$0xff]
    %v61 = vld [vmem:[#allocation7 + $0x10] sm:$0xff]
    %v62 = vld [vmem:[#allocation7 + $0x18] sm:$0xff]
    %v63 = vld [vmem:[#allocation2] sm:$0xff]
    %v64 = vld [vmem:[#allocation2 + $0x8] sm:$0xff]
    %v65 = vld [vmem:[#allocation5] sm:$0xff]
    %v66 = vld [vmem:[#allocation5 + $0x8] sm:$0xff]
    %vm67 = vcmask 130048
    %v69 = vsel %vm67, %v65, 0
    %v72 = vsel %vm67, %v66, 0
    %74 = vmatprep.subr.mxu0 0.0
    %75 = vmatpush1.msra.mxu0 0.0
    %76 = vmatprep.subr.mxu0 0.0
    %77 = vmatpush1.msra.mxu0 0.0
    %78 = vmatprep.subr.mxu0 0.0
    %79 = vmatpush1.msra.mxu0 0.0
    %80 = vmatprep.subr.mxu0 0.0
    %81 = vmatpush1.msra.mxu0 0.0
    %82 = vmatprep.subr.mxu0 0.0
    %83 = vmatpush1.msra.mxu0 0.0
    %84 = vmatprep.subr.mxu0 0.0
    %85 = vmatpush1.msra.mxu0 0.0
    %86 = vmatprep.subr.mxu0 0.0
    %87 = vmatpush1.msra.mxu0 0.0
    %88 = vmatprep.subr.mxu0 0.0
    %89 = vmatpush1.msra.mxu0 0.0
    %90 = vmatprep.subr.mxu0 0.0
    %91 = vmatpush1.msra.mxu0 0.0
    %92 = vmatprep.subr.mxu0 0.0
    %93 = vmatpush1.msra.mxu0 0.0
    %94 = vmatprep.subr.mxu0 0.0
    %95 = vmatpush1.msra.mxu0 0.0
    %96 = vmatprep.subr.mxu0 0.0
    %97 = vmatpush1.msra.mxu0 0.0
    %98 = vmatprep.subr.mxu0 0.0
    %99 = vmatpush1.msra.mxu0 0.0
    %100 = vmatprep.subr.mxu0 0.0
    %101 = vmatpush1.msra.mxu0 0.0
    %102 = vmatprep.subr.mxu0 0.0
    %103 = vmatpush1.msra.mxu0 %v62
    %104 = vmatprep.subr.mxu0 0.0
    %105 = vmatpush1.msra.mxu0 %v61
    %106 = vmatprep.subr.mxu0 0.0
    %107 = vmatpush2.msra.mxu0 0.0
    %108 = vmatprep.subr.mxu0 0.0
    %109 = vmatpush2.msra.mxu0 0.0
    %110 = vmatprep.subr.mxu0 0.0
    %111 = vmatpush2.msra.mxu0 0.0
    %112 = vmatprep.subr.mxu0 0.0
    %113 = vmatpush2.msra.mxu0 0.0
    %114 = vmatprep.subr.mxu0 0.0
    %115 = vmatpush2.msra.mxu0 0.0
    %116 = vmatprep.subr.mxu0 0.0
    %117 = vmatpush2.msra.mxu0 0.0
    %118 = vmatprep.subr.mxu0 0.0
    %119 = vmatpush2.msra.mxu0 0.0
    %120 = vmatprep.subr.mxu0 0.0
    %121 = vmatpush2.msra.mxu0 0.0
    %122 = vmatprep.subr.mxu0 0.0
    %123 = vmatpush2.msra.mxu0 0.0
    %124 = vmatprep.subr.mxu0 0.0
    %125 = vmatpush2.msra.mxu0 0.0
    %126 = vmatprep.subr.mxu0 0.0
    %127 = vmatpush2.msra.mxu0 0.0
    %128 = vmatprep.subr.mxu0 0.0
    %129 = vmatpush2.msra.mxu0 0.0
    %130 = vmatprep.subr.mxu0 0.0
    %131 = vmatpush2.msra.mxu0 0.0
    %132 = vmatprep.subr.mxu0 0.0
    %133 = vmatpush2.msra.mxu0 0.0
    %134 = vmatprep.subr.mxu0 0.0
    %135 = vmatpush2.msra.mxu0 0.0
    %136 = vmatprep.subr.mxu0 0.0
    %137 = vmatpush2.msra.mxu0 0.0
    %138 = vmatprep.mubr.f32.mxu0 0.0
    %139 = vmatmul.mubr.f32.gmra.mxu0 %v69
    %v140 = vpop.f32.mrf.mxu0
    %v141 = vadd.f32 0.0, %v140
    %v142 = vpop.f32.mrf.mxu0
    %143 = vmatprep.mubr.f32.mxu0 0.0
    %144 = vmatmul.mubr.f32.gmra.mxu0 %v72
    %v145 = vpop.f32.mrf.mxu0
    %v146 = vadd.f32 0.0, %v145
    %v147 = vpop.f32.mrf.mxu0
    %148 = vdwg.mxu0
    %v150 = vsel %vm67, %v63, 0
    %v153 = vsel %vm67, %v64, 0
    %155 = vmatprep.subr.mxu0 0.0
    %156 = vmatpush1.msra.mxu0 0.0
    %157 = vmatprep.subr.mxu0 0.0
    %158 = vmatpush1.msra.mxu0 0.0
    %159 = vmatprep.subr.mxu0 0.0
    %160 = vmatpush1.msra.mxu0 0.0
    %161 = vmatprep.subr.mxu0 0.0
    %162 = vmatpush1.msra.mxu0 0.0
    %163 = vmatprep.subr.mxu0 0.0
    %164 = vmatpush1.msra.mxu0 0.0
    %165 = vmatprep.subr.mxu0 0.0
    %166 = vmatpush1.msra.mxu0 0.0
    %167 = vmatprep.subr.mxu0 0.0
    %168 = vmatpush1.msra.mxu0 0.0
    %169 = vmatprep.subr.mxu0 0.0
    %170 = vmatpush1.msra.mxu0 0.0
    %171 = vmatprep.subr.mxu0 0.0
    %172 = vmatpush1.msra.mxu0 0.0
    %173 = vmatprep.subr.mxu0 0.0
    %174 = vmatpush1.msra.mxu0 0.0
    %175 = vmatprep.subr.mxu0 0.0
    %176 = vmatpush1.msra.mxu0 0.0
    %177 = vmatprep.subr.mxu0 0.0
    %178 = vmatpush1.msra.mxu0 0.0
    %179 = vmatprep.subr.mxu0 0.0
    %180 = vmatpush1.msra.mxu0 0.0
    %181 = vmatprep.subr.mxu0 0.0
    %182 = vmatpush1.msra.mxu0 0.0
    %183 = vmatprep.subr.mxu0 0.0
    %184 = vmatpush1.msra.mxu0 %v60
    %185 = vmatprep.subr.mxu0 0.0
    %186 = vmatpush1.msra.mxu0 %v59
    %187 = vmatprep.subr.mxu0 0.0
    %188 = vmatpush2.msra.mxu0 0.0
    %189 = vmatprep.subr.mxu0 0.0
    %190 = vmatpush2.msra.mxu0 0.0
    %191 = vmatprep.subr.mxu0 0.0
    %192 = vmatpush2.msra.mxu0 0.0
    %193 = vmatprep.subr.mxu0 0.0
    %194 = vmatpush2.msra.mxu0 0.0
    %195 = vmatprep.subr.mxu0 0.0
    %196 = vmatpush2.msra.mxu0 0.0
    %197 = vmatprep.subr.mxu0 0.0
    %198 = vmatpush2.msra.mxu0 0.0
    %199 = vmatprep.subr.mxu0 0.0
    %200 = vmatpush2.msra.mxu0 0.0
    %201 = vmatprep.subr.mxu0 0.0
    %202 = vmatpush2.msra.mxu0 0.0
    %203 = vmatprep.subr.mxu0 0.0
    %204 = vmatpush2.msra.mxu0 0.0
    %205 = vmatprep.subr.mxu0 0.0
    %206 = vmatpush2.msra.mxu0 0.0
    %207 = vmatprep.subr.mxu0 0.0
    %208 = vmatpush2.msra.mxu0 0.0
    %209 = vmatprep.subr.mxu0 0.0
    %210 = vmatpush2.msra.mxu0 0.0
    %211 = vmatprep.subr.mxu0 0.0
    %212 = vmatpush2.msra.mxu0 0.0
    %213 = vmatprep.subr.mxu0 0.0
    %214 = vmatpush2.msra.mxu0 0.0
    %215 = vmatprep.subr.mxu0 0.0
    %216 = vmatpush2.msra.mxu0 0.0
    %217 = vmatprep.subr.mxu0 0.0
    %218 = vmatpush2.msra.mxu0 0.0
    %219 = vmatprep.mubr.f32.mxu0 0.0
    %220 = vmatmul.mubr.f32.gmra.mxu0 %v150
    %v221 = vpop.f32.mrf.mxu0
    %v222 = vadd.f32 %v141, %v221
    %v223 = vpop.f32.mrf.mxu0
    %224 = vmatprep.mubr.f32.mxu0 0.0
    %225 = vmatmul.mubr.f32.gmra.mxu0 %v153
    %v226 = vpop.f32.mrf.mxu0
    %v227 = vadd.f32 %v146, %v226
    %v228 = vpop.f32.mrf.mxu0
    %229 = vdwg.mxu0
    %v230 = vld [vmem:[%s3] sm:$0x1]
    %v232 = vlaneseq
    %v233 = vshrl.u32 %v232, 7
    %v234 = vsub.s32 0, %v233
    %v235 = vrot.slane %v230, %v234
    %v237 = vadd.f32 %v222, %v235
    %v238 = vadd.f32 %v227, %v235
    %vm239 = vcmask 261120
    %240 = vst.msk [vmem:[#allocation8] sm:$0xff] %vm239, %v237
    %241 = vst.msk [vmem:[#allocation8 + $0x8] sm:$0xff] %vm239, %v238
    // Predicated region
    $region30: #{tpu_custom_call.1} parent=1 // pred_check
      _
    $region31: #{tpu_custom_call.1} parent=1 // pred_check_branch
      %243 = sbr.rel (0) target = $region33
    $region32: #{tpu_custom_call.1} parent=1 // pred_region
      %s245 = ssub.s32 256, 256
      %246 = vsyncadd [#allocation4], %s245
      %s247 = sshll.u32 [#allocation8], 4
      %s248 = int_to_ptr.vmem [resolvable:$true] %s247
      %253 = dma.vmem_to_hbm [thread:$0]  %s248, 256, %s4, [#allocation4], 128, 128, 8
    $region33: #{tpu_custom_call.1} parent=1 // pred_fallthru
      _
    // Predicated region
    $region34: #{tpu_custom_call.1} parent=1 // pred_check
      _
    $region35: #{tpu_custom_call.1} parent=1 // pred_check_branch
      %255 = sbr.rel (0) target = $region37
    $region36: #{tpu_custom_call.1} parent=1 // pred_region
      %256 = dma.done [#allocation4], 256
    $region37: #{tpu_custom_call.1} parent=1 // pred_fallthru
      _
    %257 = vsyncpa [#allocation3], 1
    %258 = vsyncpa [#allocation6], 1
    %259 = vsyncpa [#allocation4], 1

</llo_original>
